<compile_context>
chip_gen: v7x
topology: tpu7x:2x2x1
jax: 0.10.0
libtpu: 0.0.40
codegen_flags: <defaults>
</compile_context>

<pallas_src>
import functools
import math

import jax
import jax.numpy as jnp
from jax.experimental import pallas as pl
from jax.experimental.pallas import tpu as pltpu


def _pick_tile(dim, pref, align):
    """Largest tile <= pref that evenly divides `dim` and is a multiple of
    `align` (honours the (8, 128) layout rule); falls back to the full dim,
    which always satisfies the rule, instead of creating ragged blocks."""
    if dim <= pref:
        return dim
    t = (pref // align) * align
    while t >= align:
        if dim % t == 0:
            return t
        t -= align
    return dim


# ---------------------------------------------------------------------------
# Linear:  y = x @ W + b   (used for the module's 4 nn.Linear layers)
# ---------------------------------------------------------------------------
def _linear_kernel(x_ref, w_ref, b_ref, o_ref, acc_ref):
    @pl.when(pl.program_id(2) == 0)
    def _():
        acc_ref[...] = jnp.zeros_like(acc_ref)

    acc_ref[...] += jnp.dot(
        x_ref[...], w_ref[...], preferred_element_type=jnp.float32
    )

    @pl.when(pl.program_id(2) == pl.num_programs(2) - 1)
    def _():
        o_ref[...] = (acc_ref[...] + b_ref[...].astype(jnp.float32)).astype(o_ref.dtype)


def linear(x, w, b, *, tm_pref=512, tn_pref=256, tk_pref=512):
    """x: (M, K), w: (K, N), b: (N,)  ->  (M, N)."""
    M, K = x.shape
    Kw, N = w.shape
    assert K == Kw
    tm = _pick_tile(M, tm_pref, 8)
    tn = _pick_tile(N, tn_pref, 128)
    tk = _pick_tile(K, tk_pref, 128)
    grid = (M // tm, N // tn, K // tk)

    return pl.pallas_call(
        _linear_kernel,
        out_shape=jax.ShapeDtypeStruct((M, N), x.dtype),
        grid_spec=pltpu.PrefetchScalarGridSpec(
            num_scalar_prefetch=0,
            grid=grid,
            in_specs=[
                pl.BlockSpec((tm, tk), lambda i, j, k: (i, k)),
                pl.BlockSpec((tk, tn), lambda i, j, k: (k, j)),
                pl.BlockSpec((1, tn), lambda i, j, k: (0, j)),
            ],
            out_specs=pl.BlockSpec((tm, tn), lambda i, j, k: (i, j)),
            scratch_shapes=[pltpu.VMEM((tm, tn), jnp.float32)],
        ),
        compiler_params=pltpu.CompilerParams(
            dimension_semantics=("parallel", "parallel", "arbitrary"),
            vmem_limit_bytes=32 * 1024 * 1024,  # raise v5e's 16 MiB default
        ),
    )(x, w, b.reshape(1, N))


# ---------------------------------------------------------------------------
# Scaled-dot-product attention, all heads per (batch, q-tile), kv-tiled
# online softmax (flash-style).
# ---------------------------------------------------------------------------
def _mha_attention_kernel(*refs, scale, have_mask):
    if have_mask:
        mask_ref, q_ref, k_ref, v_ref, o_ref, m_sc, l_sc, acc_sc = refs
    else:
        q_ref, k_ref, v_ref, o_ref, m_sc, l_sc, acc_sc = refs

    j = pl.program_id(2)

    @pl.when(j == 0)
    def _():
        m_sc[...] = jnp.full(m_sc.shape, -jnp.inf, jnp.float32)
        l_sc[...] = jnp.zeros(l_sc.shape, jnp.float32)
        acc_sc[...] = jnp.zeros(acc_sc.shape, jnp.float32)

    # Native-dtype operands for the MXU (no f32 up-cast); fold 1/sqrt(d_k)
    # into the small q tile instead of the (tq, tk) score matrix.
    q = q_ref[...] * scale                     # (tq, h, d_k)
    qh = jnp.swapaxes(q, 0, 1)                 # (h, tq, d_k)
    kh = jnp.swapaxes(k_ref[...], 0, 1)        # (h, tk, d_k)
    vh = jnp.swapaxes(v_ref[...], 0, 1)        # (h, tk, d_k)

    # per-head scores, f32 accumulation
    s = jnp.einsum("hqd,hkd->hqk", qh, kh,
                   preferred_element_type=jnp.float32)      # (h, tq, tk)

    if have_mask:
        m = mask_ref[...]                      # (tq, tk) int8, shared by heads
        s = jnp.where((m == 0)[None, :, :], jnp.float32(-1e9), s)

    # online (numerically stable) softmax along the key axis
    m_prev = m_sc[...]
    m_new = jnp.maximum(m_prev, jnp.max(s, axis=-1, keepdims=True))
    alpha = jnp.exp(m_prev - m_new)
    p = jnp.exp(s - m_new)
    l_sc[...] = alpha * l_sc[...] + jnp.sum(p, axis=-1, keepdims=True)
    acc_sc[...] = alpha * acc_sc[...] + jnp.einsum(
        "hqk,hkd->hqd", p.astype(vh.dtype), vh,
        preferred_element_type=jnp.float32)
    m_sc[...] = m_new

    @pl.when(j == pl.num_programs(2) - 1)
    def _():
        # normalization folded into the context; divide goes to the EUP slot
        ctx = acc_sc[...] * pl.reciprocal(l_sc[...], approx=True)   # (h, tq, d_k)
        o_ref[...] = jnp.swapaxes(ctx, 0, 1).astype(o_ref.dtype)    # (tq, h, d_k)


def mha_attention(q, k, v, mask=None, *, tq_pref=128, tk_pref=256):
    """q: (B, Sq, h, d_k); k, v: (B, Sk, h, d_k); mask: (B, Sq, Sk) or None.
    Returns (B, Sq, h, d_k) — same memory layout as (B, Sq, h*d_k)."""
    B, Sq, h, dk = q.shape
    Sk = k.shape[1]
    scale = 1.0 / math.sqrt(dk)
    tq = _pick_tile(Sq, tq_pref, 8)
    tk = _pick_tile(Sk, tk_pref, 128)
    grid = (B, Sq // tq, Sk // tk)

    q_spec = pl.BlockSpec((None, tq, h, dk), lambda b, i, j: (b, i, 0, 0))
    k_spec = pl.BlockSpec((None, tk, h, dk), lambda b, i, j: (b, j, 0, 0))
    v_spec = pl.BlockSpec((None, tk, h, dk), lambda b, i, j: (b, j, 0, 0))
    o_spec = pl.BlockSpec((None, tq, h, dk), lambda b, i, j: (b, i, 0, 0))

    have_mask = mask is not None
    if have_mask:
        mask = (mask != 0).astype(jnp.int8)    # 4x less mask DMA traffic
        in_specs = [
            pl.BlockSpec((None, tq, tk), lambda b, i, j: (b, i, j)),
            q_spec, k_spec, v_spec,
        ]
        args = (mask, q, k, v)
    else:
        in_specs = [q_spec, k_spec, v_spec]
        args = (q, k, v)

    kernel = functools.partial(
        _mha_attention_kernel, scale=scale, have_mask=have_mask
    )

    return pl.pallas_call(
        kernel,
        out_shape=jax.ShapeDtypeStruct((B, Sq, h, dk), q.dtype),
        grid_spec=pltpu.PrefetchScalarGridSpec(
            num_scalar_prefetch=0,
            grid=grid,
            in_specs=in_specs,
            out_specs=o_spec,
            scratch_shapes=[
                pltpu.VMEM((h, tq, 1), jnp.float32),   # running max
                pltpu.VMEM((h, tq, 1), jnp.float32),   # running denom
                pltpu.VMEM((h, tq, dk), jnp.float32),  # context accumulator
            ],
        ),
        compiler_params=pltpu.CompilerParams(
            dimension_semantics=("parallel", "parallel", "arbitrary"),
            vmem_limit_bytes=32 * 1024 * 1024,
        ),
    )(*args)


# ---------------------------------------------------------------------------
# Full MultiHeadedAttention forward (eval mode)
# ---------------------------------------------------------------------------
def multi_headed_attention(xq, xk, xv, params, mask=None, *, h):
    """xq/xk/xv: (B, S, d_model).  Weights stored (in_features, out_features)
    so y = x @ w + b (equivalent to torch's x @ W.T + b with W = w.T).
    mask: optional (B, Sq, Sk) with 0 = masked position.

    Head split/merge is done with FREE reshapes only (no HBM transposes):
    the attention kernel consumes (B, S, h, d_k) and writes (B, Sq, h, d_k),
    which reinterprets directly as (B, Sq, d_model) for the output Linear."""
    B, Sq, D = xq.shape
    d_k = D // h

    def proj(x, w, b):
        S = x.shape[1]
        y = linear(x.reshape(B * S, D), w, b)
        return y.reshape(B, S, h, d_k)         # free reshape, no transpose

    q = proj(xq, params["wq"], params["bq"])
    k = proj(xk, params["wk"], params["bk"])
    v = proj(xv, params["wv"], params["bv"])

    ctx = mha_attention(q, k, v, mask)                    # (B, Sq, h, d_k)
    out = linear(ctx.reshape(B * Sq, D), params["wo"], params["bo"])
    return out.reshape(B, Sq, D)


# ---------------------------------------------------------------------------
# Pure-JAX reference (mirrors the torch module exactly, eval mode)
# ---------------------------------------------------------------------------
def _reference_mha(xq, xk, xv, params, mask, h):
    B, Sq, D = xq.shape
    d_k = D // h

    def lin(x, w, b):
        return x @ w + b

    def split(t):
        return t.reshape(B, -1, h, d_k).transpose(0, 2, 1, 3)

    q = split(lin(xq, params["wq"], params["bq"]))
    k = split(lin(xk, params["wk"], params["bk"]))
    v = split(lin(xv, params["wv"], params["bv"]))

    scores = jnp.einsum("bhqd,bhkd->bhqk", q, k) / jnp.sqrt(jnp.float32(d_k))
    if mask is not None:
        scores = jnp.where(mask[:, None, :, :] == 0, jnp.float32(-1e9), scores)
    p = jax.nn.softmax(scores, axis=-1)
    ctx = jnp.einsum("bhqk,bhkd->bhqd", p, v)
    ctx = ctx.transpose(0, 2, 1, 3).reshape(B, Sq, D)
    return lin(ctx, params["wo"], params["bo"])


if __name__ == "__main__":
    B, S, d_model, h = 2, 8, 32, 4
    key = jax.random.PRNGKey(0)
    keys = jax.random.split(key, 11)

    xq = jax.random.normal(keys[0], (B, S, d_model), dtype=jnp.float32)
    xk = jax.random.normal(keys[1], (B, S, d_model), dtype=jnp.float32)
    xv = jax.random.normal(keys[2], (B, S, d_model), dtype=jnp.float32)

    def mk_w(k_):
        return 0.1 * jax.random.normal(k_, (d_model, d_model), dtype=jnp.float32)

    def mk_b(k_):
        return 0.1 * jax.random.normal(k_, (d_model,), dtype=jnp.float32)

    params = {
        "wq": mk_w(keys[3]), "bq": mk_b(keys[4]),
        "wk": mk_w(keys[5]), "bk": mk_b(keys[6]),
        "wv": mk_w(keys[7]), "bv": mk_b(keys[8]),
        "wo": mk_w(keys[9]), "bo": mk_b(keys[10]),
    }

    # padding-style mask: batch 0 cannot attend to the last two key positions.
    mask = jnp.ones((B, S, S), dtype=jnp.int32)
    mask = mask.at[0, :, -2:].set(0)

    out = multi_headed_attention(xq, xk, xv, params, mask=mask, h=h)
    out = jax.block_until_ready(out)

    ref = _reference_mha(xq, xk, xv, params, mask, h)
    assert out.shape == (B, S, d_model) and out.dtype == xq.dtype
    max_err = float(jnp.max(jnp.abs(out - ref)))
    assert max_err < 1e-2, f"mismatch vs reference: max abs err = {max_err}"

    print("KERNEL_OK")
</pallas_src>

<mosaic_0001>
module attributes {stable_mosaic.version = 11 : i64} {
  func.func @_linear_kernel(%arg0: i32, %arg1: i32, %arg2: i32, %arg3: memref<16x32xf32, #tpu.memory_space<vmem>>, %arg4: memref<32x32xf32, #tpu.memory_space<vmem>>, %arg5: memref<1x32xf32, #tpu.memory_space<vmem>>, %arg6: memref<16x32xf32, #tpu.memory_space<vmem>>, %arg7: memref<16x32xf32, #tpu.memory_space<vmem>>) attributes {dimension_semantics = [#tpu.dimension_semantics<parallel>, #tpu.dimension_semantics<parallel>, #tpu.dimension_semantics<arbitrary>], iteration_bounds = array<i64: 1, 1, 1>, scalar_prefetch = 0 : i64, scratch_operands = 1 : i64, tpu.core_type = #tpu.core_type<tc>, window_params = [{transform_indices = @transform_0, window_bounds = array<i64: 16, 32>}, {transform_indices = @transform_1, window_bounds = array<i64: 32, 32>}, {transform_indices = @transform_2, window_bounds = array<i64: 1, 32>}, {transform_indices = @transform_3, window_bounds = array<i64: 16, 32>}]} {
    %c0_i32 = arith.constant 0 : i32
    %0 = arith.cmpi eq, %arg2, %c0_i32 : i32
    %1 = arith.extui %0 : i1 to i32
    %c0_i32_0 = arith.constant 0 : i32
    %2 = arith.cmpi ne, %1, %c0_i32_0 : i32
    scf.if %2 {
      %cst_10 = arith.constant 0.000000e+00 : f32
      %12 = vector.broadcast %cst_10 : f32 to vector<16x32xf32>
      %c0_11 = arith.constant 0 : index
      %c0_12 = arith.constant 0 : index
      %13 = vector.load %arg7[%c0_11, %c0_12] : memref<16x32xf32, #tpu.memory_space<vmem>>, vector<16x32xf32>
      tpu.vector_store %arg7[%c0_11, %c0_12], %12 {strides = array<i32>} : memref<16x32xf32, #tpu.memory_space<vmem>>, vector<16x32xf32>,
    } else {
    }
    %c0 = arith.constant 0 : index
    %c0_1 = arith.constant 0 : index
    %3 = vector.load %arg7[%c0, %c0_1] : memref<16x32xf32, #tpu.memory_space<vmem>>, vector<16x32xf32>
    %c0_2 = arith.constant 0 : index
    %c0_3 = arith.constant 0 : index
    %4 = vector.load %arg3[%c0_2, %c0_3] : memref<16x32xf32, #tpu.memory_space<vmem>>, vector<16x32xf32>
    %c0_4 = arith.constant 0 : index
    %c0_5 = arith.constant 0 : index
    %5 = vector.load %arg4[%c0_4, %c0_5] : memref<32x32xf32, #tpu.memory_space<vmem>>, vector<32x32xf32>
    %cst = arith.constant dense<0.000000e+00> : vector<16x32xf32>
    %6 = tpu.matmul %4, %5, %cst {dimension_numbers = #tpu.dot_dimension_numbers<[1], [0], [0], [1], [0, 0, 1, 1], [], []>} : vector<16x32xf32>, vector<32x32xf32>, vector<16x32xf32> -> vector<16x32xf32>
    %7 = arith.addf %3, %6 : vector<16x32xf32>
    %c0_6 = arith.constant 0 : index
    %c0_7 = arith.constant 0 : index
    %8 = vector.load %arg7[%c0_6, %c0_7] : memref<16x32xf32, #tpu.memory_space<vmem>>, vector<16x32xf32>
    tpu.vector_store %arg7[%c0_6, %c0_7], %7 {strides = array<i32>} : memref<16x32xf32, #tpu.memory_space<vmem>>, vector<16x32xf32>,
    %c0_i32_8 = arith.constant 0 : i32
    %9 = arith.cmpi eq, %arg2, %c0_i32_8 : i32
    %10 = arith.extui %9 : i1 to i32
    %c0_i32_9 = arith.constant 0 : i32
    %11 = arith.cmpi ne, %10, %c0_i32_9 : i32
    scf.if %11 {
      %c0_10 = arith.constant 0 : index
      %c0_11 = arith.constant 0 : index
      %12 = vector.load %arg7[%c0_10, %c0_11] : memref<16x32xf32, #tpu.memory_space<vmem>>, vector<16x32xf32>
      %c0_12 = arith.constant 0 : index
      %c0_13 = arith.constant 0 : index
      %13 = vector.load %arg5[%c0_12, %c0_13] : memref<1x32xf32, #tpu.memory_space<vmem>>, vector<1x32xf32>
      %14 = vector.broadcast %13 : vector<1x32xf32> to vector<16x32xf32>
      %15 = arith.addf %12, %14 : vector<16x32xf32>
      %c0_14 = arith.constant 0 : index
      %c0_15 = arith.constant 0 : index
      %16 = vector.load %arg6[%c0_14, %c0_15] : memref<16x32xf32, #tpu.memory_space<vmem>>, vector<16x32xf32>
      tpu.vector_store %arg6[%c0_14, %c0_15], %15 {strides = array<i32>} : memref<16x32xf32, #tpu.memory_space<vmem>>, vector<16x32xf32>,
    } else {
    }
    return
  }
  func.func @transform_0(%arg0: i32, %arg1: i32, %arg2: i32) -> (i32, i32) {
    %c0_i32 = arith.constant 0 : i32
    return %arg0, %arg2 : i32, i32
  }
  func.func @transform_1(%arg0: i32, %arg1: i32, %arg2: i32) -> (i32, i32) {
    %c0_i32 = arith.constant 0 : i32
    return %arg2, %arg1 : i32, i32
  }
  func.func @transform_2(%arg0: i32, %arg1: i32, %arg2: i32) -> (i32, i32) {
    %c0_i32 = arith.constant 0 : i32
    %c0_i32_0 = arith.constant 0 : i32
    return %c0_i32, %arg1 : i32, i32
  }
  func.func @transform_3(%arg0: i32, %arg1: i32, %arg2: i32) -> (i32, i32) {
    %c0_i32 = arith.constant 0 : i32
    return %arg0, %arg1 : i32, i32
  }
}

</mosaic_0001>

<llo_original>
// kernel: tpu_custom_call.1
$region0: #{tpu_custom_call.1}
  #allocation0 [shape = 'u32[]', space=smem, size = 0x4, offset = 0x4, fixed_abs, tag = 'smem constant byte address 0x4 - core index']
  #allocation1 [shape = 'u32[144,128]{1,0:T(1,128)}', space=vmem, size = 0x12000, scoped, tag = 'internal scratch']
  #allocation2 [shape = 'f32[16,32]{1,0:T(8,128)}', space=vmem, size = 0x2000, scoped, tag = 'scratch operand']
  %s0 = inlined_call_operand.hbm [shape: f32[16,32], index: 0, kind: input, shape index: {}]
  %s1 = inlined_call_operand.hbm [shape: f32[32,32], index: 1, kind: input, shape index: {}]
  %s2 = inlined_call_operand.vmem [shape: f32[1,32], index: 2, kind: input, shape index: {}]
  %s3 = inlined_call_operand.hbm [shape: f32[16,32], index: 3, kind: output, shape index: {}]
  %s4 = sld [smem:[#allocation0]]
  $region38: #{tpu_custom_call.1} parent=0
    _
  %s6 = ssub.s32 1, %s4
  %s7 = scalar_select 0, %s6, %s4
  $region1: #{tpu_custom_call.1} parent=0
    #allocation3 [shape = 'u8[8192]{0}', space=vmem, size = 0x2000, scoped, tag = 'input window, operand 0, single buffered']
    #allocation4 [shape = 's32[1]{0}', space=sflag, size = 0x4, scoped, tag = 'scoped memory for tpu_custom_call.1']
    #allocation5 [shape = 's32[1]{0}', space=sflag, size = 0x4, scoped, tag = 'scoped memory for tpu_custom_call.1']
    #allocation6 [shape = 'u8[16384]{0}', space=vmem, size = 0x4000, scoped, tag = 'input window, operand 1, single buffered']
    #allocation7 [shape = 's32[1]{0}', space=sflag, size = 0x4, scoped, tag = 'scoped memory for tpu_custom_call.1']
    #allocation8 [shape = 'u8[8192]{0}', space=vmem, size = 0x2000, scoped, tag = 'output window, operand 0, single buffered']
    %8 = vsyncpa [#allocation4], 0
    %9 = vsyncpa [#allocation7], 0
    %10 = vsyncpa [#allocation5], 0
    // Predicated region
    $region2: #{tpu_custom_call.1} parent=1 // pred_check
      _
    $region3: #{tpu_custom_call.1} parent=1 // pred_check_branch
      %12 = sbr.rel (0) target = $region5
    $region4: #{tpu_custom_call.1} parent=1 // pred_region
      %s14 = ssub.s32 256, 256
      %15 = vsyncadd [#allocation4], %s14
      %s16 = sshll.u32 [#allocation3], 4
      %s17 = int_to_ptr.vmem [resolvable:$true] %s16
      %22 = dma.hbm_to_vmem [thread:$0]  %s0, 256, %s17, [#allocation4], 128, 128, 8
    $region5: #{tpu_custom_call.1} parent=1 // pred_fallthru
      _
    // Predicated region
    $region6: #{tpu_custom_call.1} parent=1 // pred_check
      _
    $region7: #{tpu_custom_call.1} parent=1 // pred_check_branch
      %24 = sbr.rel (0) target = $region9
    $region8: #{tpu_custom_call.1} parent=1 // pred_region
      %s26 = ssub.s32 512, 512
      %27 = vsyncadd [#allocation7], %s26
      %s28 = sshll.u32 [#allocation6], 4
      %s29 = int_to_ptr.vmem [resolvable:$true] %s28
      %34 = dma.hbm_to_vmem [thread:$0]  %s1, 512, %s29, [#allocation7], 128, 128, 8
    $region9: #{tpu_custom_call.1} parent=1 // pred_fallthru
      _
    // Predicated region
    $region10: #{tpu_custom_call.1} parent=1 // pred_check
      _
    $region11: #{tpu_custom_call.1} parent=1 // pred_check_branch
      %36 = sbr.rel (0) target = $region13
    $region12: #{tpu_custom_call.1} parent=1 // pred_region
      _
    $region13: #{tpu_custom_call.1} parent=1 // pred_fallthru
      _
    // Predicated region
    $region14: #{tpu_custom_call.1} parent=1 // pred_check
      _
    $region15: #{tpu_custom_call.1} parent=1 // pred_check_branch
      %38 = sbr.rel (0) target = $region17
    $region16: #{tpu_custom_call.1} parent=1 // pred_region
      %39 = dma.done [#allocation4], 256
    $region17: #{tpu_custom_call.1} parent=1 // pred_fallthru
      _
    // Predicated region
    $region18: #{tpu_custom_call.1} parent=1 // pred_check
      _
    $region19: #{tpu_custom_call.1} parent=1 // pred_check_branch
      %41 = sbr.rel (0) target = $region21
    $region20: #{tpu_custom_call.1} parent=1 // pred_region
      %42 = dma.done [#allocation7], 512
    $region21: #{tpu_custom_call.1} parent=1 // pred_fallthru
      _
    %p43 = scmp.eq.s32.totalorder 0, 0
    // Predicated region
    $region22: #{tpu_custom_call.1} parent=1 // pred_check
      %p44 = pneg %p43
    $region23: #{tpu_custom_call.1} parent=1 // pred_check_branch
      %46 = sbr.rel (%p44) target = $region25
    $region24: #{tpu_custom_call.1} parent=1 // pred_region
      %vm47 = vcmask 261120
      %48 = vst.msk [vmem:[#allocation2] sm:$0xff] %vm47, 0.0
      %49 = vst.msk [vmem:[#allocation2 + $0x8] sm:$0xff] %vm47, 0.0
    $region25: #{tpu_custom_call.1} parent=1 // pred_fallthru
      _
    %v50 = vld [vmem:[#allocation2] sm:$0xff]
    %v51 = vld [vmem:[#allocation2 + $0x8] sm:$0xff]
    %v52 = vld [vmem:[#allocation3] sm:$0xff]
    %v53 = vld [vmem:[#allocation3 + $0x8] sm:$0xff]
    %v54 = vld [vmem:[#allocation6] sm:$0xff]
    %v55 = vld [vmem:[#allocation6 + $0x8] sm:$0xff]
    %v56 = vld [vmem:[#allocation6 + $0x10] sm:$0xff]
    %v57 = vld [vmem:[#allocation6 + $0x18] sm:$0xff]
    %vm58 = vcmask 261120
    %v60 = vsel %vm58, %v52, 0
    %v63 = vsel %vm58, %v53, 0
    %65 = vmatprep.subr.mxu0 0.0
    %66 = vmatpush1.msra.mxu0 %v54
    %67 = vmatprep.subr.mxu0 0.0
    %68 = vmatpush1.msra.mxu0 %v55
    %69 = vmatprep.subr.mxu0 0.0
    %70 = vmatpush1.msra.mxu0 %v56
    %71 = vmatprep.subr.mxu0 0.0
    %72 = vmatpush1.msra.mxu0 %v57
    %73 = vmatprep.subr.mxu0 0.0
    %74 = vmatpush1.msra.mxu0 0.0
    %75 = vmatprep.subr.mxu0 0.0
    %76 = vmatpush1.msra.mxu0 0.0
    %77 = vmatprep.subr.mxu0 0.0
    %78 = vmatpush1.msra.mxu0 0.0
    %79 = vmatprep.subr.mxu0 0.0
    %80 = vmatpush1.msra.mxu0 0.0
    %81 = vmatprep.subr.mxu0 0.0
    %82 = vmatpush1.msra.mxu0 0.0
    %83 = vmatprep.subr.mxu0 0.0
    %84 = vmatpush1.msra.mxu0 0.0
    %85 = vmatprep.subr.mxu0 0.0
    %86 = vmatpush1.msra.mxu0 0.0
    %87 = vmatprep.subr.mxu0 0.0
    %88 = vmatpush1.msra.mxu0 0.0
    %89 = vmatprep.subr.mxu0 0.0
    %90 = vmatpush1.msra.mxu0 0.0
    %91 = vmatprep.subr.mxu0 0.0
    %92 = vmatpush1.msra.mxu0 0.0
    %93 = vmatprep.subr.mxu0 0.0
    %94 = vmatpush1.msra.mxu0 0.0
    %95 = vmatprep.subr.mxu0 0.0
    %96 = vmatpush1.msra.mxu0 0.0
    %97 = vmatprep.subr.mxu0 0.0
    %98 = vmatpush1.msra.mxu0 0.0
    %99 = vmatprep.subr.mxu0 0.0
    %100 = vmatpush1.msra.mxu0 0.0
    %101 = vmatprep.subr.mxu0 0.0
    %102 = vmatpush1.msra.mxu0 0.0
    %103 = vmatprep.subr.mxu0 0.0
    %104 = vmatpush1.msra.mxu0 0.0
    %105 = vmatprep.subr.mxu0 0.0
    %106 = vmatpush1.msra.mxu0 0.0
    %107 = vmatprep.subr.mxu0 0.0
    %108 = vmatpush1.msra.mxu0 0.0
    %109 = vmatprep.subr.mxu0 0.0
    %110 = vmatpush1.msra.mxu0 0.0
    %111 = vmatprep.subr.mxu0 0.0
    %112 = vmatpush1.msra.mxu0 0.0
    %113 = vmatprep.subr.mxu0 0.0
    %114 = vmatpush1.msra.mxu0 0.0
    %115 = vmatprep.subr.mxu0 0.0
    %116 = vmatpush1.msra.mxu0 0.0
    %117 = vmatprep.subr.mxu0 0.0
    %118 = vmatpush1.msra.mxu0 0.0
    %119 = vmatprep.subr.mxu0 0.0
    %120 = vmatpush1.msra.mxu0 0.0
    %121 = vmatprep.subr.mxu0 0.0
    %122 = vmatpush1.msra.mxu0 0.0
    %123 = vmatprep.subr.mxu0 0.0
    %124 = vmatpush1.msra.mxu0 0.0
    %125 = vmatprep.subr.mxu0 0.0
    %126 = vmatpush1.msra.mxu0 0.0
    %127 = vmatprep.subr.mxu0 0.0
    %128 = vmatpush1.msra.mxu0 0.0
    %129 = vmatprep.mubr.f32.mxu0 0.0
    %130 = vmatmul.mubr.f32.gmra.mrb[0].mxu0 %v60
    %v131 = vpop.f32.mrb[0].mxu0
    %v132 = vadd.f32 0.0, %v131
    %v133 = vpop.f32.mrb[0].mxu0
    %134 = vmatprep.mubr.f32.mxu0 0.0
    %135 = vmatmul.mubr.f32.gmra.mrb[0].mxu0 %v63
    %v136 = vpop.f32.mrb[0].mxu0
    %v137 = vadd.f32 0.0, %v136
    %v138 = vpop.f32.mrb[0].mxu0
    %139 = vdwg.mxu0
    %v140 = vadd.f32 %v50, %v132
    %v141 = vadd.f32 %v51, %v137
    %142 = vst.msk [vmem:[#allocation2] sm:$0xff] %vm58, %v140
    %143 = vst.msk [vmem:[#allocation2 + $0x8] sm:$0xff] %vm58, %v141
    // Predicated region
    $region26: #{tpu_custom_call.1} parent=1 // pred_check
      %p144 = pneg %p43
    $region27: #{tpu_custom_call.1} parent=1 // pred_check_branch
      %146 = sbr.rel (%p144) target = $region29
    $region28: #{tpu_custom_call.1} parent=1 // pred_region
      %v147 = vld [vmem:[#allocation2] sm:$0xff]
      %v148 = vld [vmem:[#allocation2 + $0x8] sm:$0xff]
      %v149 = vld [vmem:[%s2] sm:$0x1]
      %v151 = vlaneseq
      %v152 = vshrl.u32 %v151, 7
      %v153 = vsub.s32 0, %v152
      %v154 = vrot.slane %v149, %v153
      %v156 = vadd.f32 %v147, %v154
      %v157 = vadd.f32 %v148, %v154
      %158 = vst.msk [vmem:[#allocation8] sm:$0xff] %vm58, %v156
      %159 = vst.msk [vmem:[#allocation8 + $0x8] sm:$0xff] %vm58, %v157
    $region29: #{tpu_custom_call.1} parent=1 // pred_fallthru
      _
    // Predicated region
    $region30: #{tpu_custom_call.1} parent=1 // pred_check
      _
    $region31: #{tpu_custom_call.1} parent=1 // pred_check_branch
      %161 = sbr.rel (0) target = $region33
    $region32: #{tpu_custom_call.1} parent=1 // pred_region
      %s163 = ssub.s32 256, 256
      %164 = vsyncadd [#allocation5], %s163
      %s165 = sshll.u32 [#allocation8], 4
      %s166 = int_to_ptr.vmem [resolvable:$true] %s165
      %171 = dma.vmem_to_hbm [thread:$0]  %s166, 256, %s3, [#allocation5], 128, 128, 8
    $region33: #{tpu_custom_call.1} parent=1 // pred_fallthru
      _
    // Predicated region
    $region34: #{tpu_custom_call.1} parent=1 // pred_check
      _
    $region35: #{tpu_custom_call.1} parent=1 // pred_check_branch
      %173 = sbr.rel (0) target = $region37
    $region36: #{tpu_custom_call.1} parent=1 // pred_region
      %174 = dma.done [#allocation5], 256
    $region37: #{tpu_custom_call.1} parent=1 // pred_fallthru
      _
    %175 = vsyncpa [#allocation4], 1
    %176 = vsyncpa [#allocation7], 1
    %177 = vsyncpa [#allocation5], 1

</llo_original>
